<compile_context>
chip_gen: v6e
topology: v6e:2x2x1
jax: 0.10.0
libtpu: 0.0.40
codegen_flags: <defaults>
</compile_context>

<pallas_src>
import jax
import jax.numpy as jnp
import numpy as np
from jax.experimental import pallas as pl
from jax.experimental.pallas import tpu as pltpu

NEG_SLOPE = 0.2


def _round_up(x, m):
    return ((x + m - 1) // m) * m


def _leaky(x):
    return jnp.where(x >= 0, x, NEG_SLOPE * x)


# ----------------------------------------------------------------------------
# Kernel: one (tm, Kp) x (Kp, Cp) matmul tile + bias + LeakyReLU.
#   a_ref : (tm, Kp) bf16   lane-packed im2col rows (taps*channels, zero-padded)
#   w_ref : (Kp, Cp) bf16   conv weight as a matrix (zero-padded, grid-resident)
#   b_ref : (1,  Cp) f32    bias (zero-padded, grid-resident)
#   o_ref : (tm, Cp) f32    lane-dense output tile
# ----------------------------------------------------------------------------
def _upscale_matmul_kernel(a_ref, w_ref, b_ref, o_ref):
    acc = jnp.dot(a_ref[...], w_ref[...], preferred_element_type=jnp.float32)
    o_ref[...] = _leaky(acc + b_ref[...])


# ----------------------------------------------------------------------------
# Wrapper: NCHW in / NCHW out (matches the PyTorch module).
# ----------------------------------------------------------------------------
def upscale_forward(x_nchw, weight, bias, *, tm=512):
    N, C, H, W = x_nchw.shape
    Cout, Cin, KH, KW = weight.shape
    assert (Cout, Cin, KH, KW) == (C, C, 3, 3)
    Hu, Wu = 2 * H, 2 * W

    # --- glue (plain JAX): NHWC, nearest 2x upsample, spatial zero-pad ---
    x = jnp.transpose(x_nchw, (0, 2, 3, 1)).astype(jnp.float32)       # NHWC
    x_up = jnp.repeat(jnp.repeat(x, 2, axis=1), 2, axis=2)            # nearest 2x
    x_pad = jnp.pad(x_up, ((0, 0), (1, 1), (1, 1), (0, 0)))

    # --- lane-packed im2col: K = 9*Cin (taps x channels) on the lane dim ---
    # TODO(synk): for very large C/spatial sizes a fused halo-tiled direct conv
    # would avoid the 9x tap replication in HBM; at ESRGAN channel counts the
    # lane-dense single-matmul form below is the simpler, MXU-friendly choice.
    taps = [x_pad[:, kh:kh + Hu, kw:kw + Wu, :]
            for kh in range(3) for kw in range(3)]
    a = jnp.concatenate(taps, axis=-1).reshape(N * Hu * Wu, 9 * Cin)

    K = 9 * Cin
    Kp = _round_up(K, 128)             # lane-dense matmul K dim
    Cp = _round_up(Cout, 128)          # lane-dense output / MXU N dim
    M = N * Hu * Wu
    tm = min(tm, _round_up(M, 8))      # rows per grid step (multiple of 8)
    Mp = _round_up(M, tm)

    a = jnp.pad(a, ((0, Mp - M), (0, Kp - K))).astype(jnp.bfloat16)

    # PyTorch weight (Cout, Cin, kh, kw) -> (kh, kw, Cin, Cout) -> (9*Cin, Cout)
    # (row order matches the tap concatenation order above).
    w_mat = jnp.transpose(weight, (2, 3, 1, 0)).reshape(K, Cout)
    w_mat = jnp.pad(w_mat, ((0, Kp - K), (0, Cp - Cout))).astype(jnp.bfloat16)
    b_row = jnp.pad(bias.reshape(1, Cout).astype(jnp.float32),
                    ((0, 0), (0, Cp - Cout)))

    grid = (Mp // tm,)
    out = pl.pallas_call(
        _upscale_matmul_kernel,
        out_shape=jax.ShapeDtypeStruct((Mp, Cp), jnp.float32),
        grid_spec=pltpu.PrefetchScalarGridSpec(
            num_scalar_prefetch=0,
            grid=grid,
            in_specs=[
                pl.BlockSpec((tm, Kp), lambda i: (i, 0)),   # streamed rows
                pl.BlockSpec((Kp, Cp), lambda i: (0, 0)),   # resident weight
                pl.BlockSpec((1, Cp), lambda i: (0, 0)),    # resident bias
            ],
            out_specs=pl.BlockSpec((tm, Cp), lambda i: (i, 0)),
        ),
        compiler_params=pltpu.CompilerParams(
            dimension_semantics=("parallel",),
            vmem_limit_bytes=32 * 1024 * 1024,
        ),
    )(a, w_mat, b_row)

    y = out[:M, :Cout].reshape(N, Hu, Wu, Cout)
    return jnp.transpose(y, (0, 3, 1, 2))                   # back to NCHW


# ----------------------------------------------------------------------------
# Pure-JAX reference (XLA conv) for validation.
# ----------------------------------------------------------------------------
def _reference(x_nchw, weight, bias):
    x = jnp.transpose(x_nchw, (0, 2, 3, 1))
    x_up = jnp.repeat(jnp.repeat(x, 2, axis=1), 2, axis=2)
    w_hwio = jnp.transpose(weight, (2, 3, 1, 0))
    y = jax.lax.conv_general_dilated(
        x_up, w_hwio, (1, 1), ((1, 1), (1, 1)),
        dimension_numbers=('NHWC', 'HWIO', 'NHWC'),
        precision=jax.lax.Precision.HIGHEST) + bias
    y = jnp.where(y >= 0, y, NEG_SLOPE * y)
    return jnp.transpose(y, (0, 3, 1, 2))


if __name__ == "__main__":
    N, C, H, W = 2, 4, 16, 16

    key = jax.random.PRNGKey(0)
    k1, k2, k3 = jax.random.split(key, 3)
    weight = 0.1 * jax.random.normal(k1, (C, C, 3, 3), jnp.float32)   # conv.weight
    bias = 0.1 * jax.random.normal(k2, (C,), jnp.float32)             # conv.bias
    x = jax.random.normal(k3, (N, C, H, W), jnp.float32)              # NCHW input

    fwd = jax.jit(upscale_forward)
    out = jax.block_until_ready(fwd(x, weight, bias))

    ref = jax.block_until_ready(_reference(x, weight, bias))
    assert out.shape == (N, C, 2 * H, 2 * W), out.shape
    np.testing.assert_allclose(np.asarray(out), np.asarray(ref),
                               atol=2e-2, rtol=2e-2)

    print("KERNEL_OK")
</pallas_src>

<mosaic_0001>
module attributes {stable_mosaic.version = 11 : i64} {
  func.func @_upscale_matmul_kernel(%arg0: i32, %arg1: memref<512x128xbf16, #tpu.memory_space<vmem>>, %arg2: memref<128x128xbf16, #tpu.memory_space<vmem>>, %arg3: memref<1x128xf32, #tpu.memory_space<vmem>>, %arg4: memref<512x128xf32, #tpu.memory_space<vmem>>) attributes {dimension_semantics = [#tpu.dimension_semantics<parallel>], iteration_bounds = array<i64: 4>, scalar_prefetch = 0 : i64, scratch_operands = 0 : i64, tpu.core_type = #tpu.core_type<tc>, window_params = [{transform_indices = @transform_0, window_bounds = array<i64: 512, 128>}, {pipeline_mode = #tpu.pipeline_mode<synchronous>, transform_indices = @transform_1, window_bounds = array<i64: 128, 128>}, {pipeline_mode = #tpu.pipeline_mode<synchronous>, transform_indices = @transform_2, window_bounds = array<i64: 1, 128>}, {transform_indices = @transform_3, window_bounds = array<i64: 512, 128>}]} {
    %c0 = arith.constant 0 : index
    %c0_0 = arith.constant 0 : index
    %0 = vector.load %arg1[%c0, %c0_0] : memref<512x128xbf16, #tpu.memory_space<vmem>>, vector<512x128xbf16>
    %c0_1 = arith.constant 0 : index
    %c0_2 = arith.constant 0 : index
    %1 = vector.load %arg2[%c0_1, %c0_2] : memref<128x128xbf16, #tpu.memory_space<vmem>>, vector<128x128xbf16>
    %cst = arith.constant dense<0.000000e+00> : vector<512x128xf32>
    %2 = tpu.matmul %0, %1, %cst {dimension_numbers = #tpu.dot_dimension_numbers<[1], [0], [0], [1], [0, 0, 1, 1], [], []>} : vector<512x128xbf16>, vector<128x128xbf16>, vector<512x128xf32> -> vector<512x128xf32>
    %c0_3 = arith.constant 0 : index
    %c0_4 = arith.constant 0 : index
    %3 = vector.load %arg3[%c0_3, %c0_4] : memref<1x128xf32, #tpu.memory_space<vmem>>, vector<1x128xf32>
    %4 = vector.broadcast %3 : vector<1x128xf32> to vector<512x128xf32>
    %5 = arith.addf %2, %4 : vector<512x128xf32>
    %cst_5 = arith.constant 0.000000e+00 : f32
    %6 = vector.broadcast %cst_5 : f32 to vector<512x128xf32>
    %7 = arith.cmpf oge, %5, %6 : vector<512x128xf32>
    %cst_6 = arith.constant 2.000000e-01 : f32
    %8 = vector.broadcast %cst_6 : f32 to vector<512x128xf32>
    %9 = arith.mulf %8, %5 : vector<512x128xf32>
    %10 = arith.select %7, %5, %9 : vector<512x128xi1>, vector<512x128xf32>
    %c0_7 = arith.constant 0 : index
    %c0_8 = arith.constant 0 : index
    %11 = vector.load %arg4[%c0_7, %c0_8] : memref<512x128xf32, #tpu.memory_space<vmem>>, vector<512x128xf32>
    tpu.vector_store %arg4[%c0_7, %c0_8], %10 {strides = array<i32>} : memref<512x128xf32, #tpu.memory_space<vmem>>, vector<512x128xf32>,
    return
  }
  func.func @transform_0(%arg0: i32) -> (i32, i32) {
    %c0_i32 = arith.constant 0 : i32
    %c0_i32_0 = arith.constant 0 : i32
    return %arg0, %c0_i32 : i32, i32
  }
  func.func @transform_1(%arg0: i32) -> (i32, i32) {
    %c0_i32 = arith.constant 0 : i32
    %c0_i32_0 = arith.constant 0 : i32
    %c0_i32_1 = arith.constant 0 : i32
    return %c0_i32, %c0_i32_0 : i32, i32
  }
  func.func @transform_2(%arg0: i32) -> (i32, i32) {
    %c0_i32 = arith.constant 0 : i32
    %c0_i32_0 = arith.constant 0 : i32
    %c0_i32_1 = arith.constant 0 : i32
    return %c0_i32, %c0_i32_0 : i32, i32
  }
  func.func @transform_3(%arg0: i32) -> (i32, i32) {
    %c0_i32 = arith.constant 0 : i32
    %c0_i32_0 = arith.constant 0 : i32
    return %arg0, %c0_i32 : i32, i32
  }
}

</mosaic_0001>

<llo_original>
// kernel: upscale_forward.1
$region0: #{upscale_forward.1}
  #allocation0 [shape = 'u32[]', space=smem, size = 0x4, offset = 0x4, fixed_abs, tag = 'smem constant byte address 0x4 - core index']
  #allocation1 [shape = 'u32[144,128]{1,0:T(1,128)}', space=vmem, size = 0x12000, scoped, tag = 'internal scratch']
  %s0 = inlined_call_operand.vmem [shape: bf16[2048,128], index: 0, kind: input, shape index: {}]
  %s1 = inlined_call_operand.vmem [shape: bf16[128,128], index: 1, kind: input, shape index: {}]
  %s2 = inlined_call_operand.vmem [shape: f32[1,128], index: 2, kind: input, shape index: {}]
  %s3 = inlined_call_operand.vmem [shape: f32[2048,128], index: 3, kind: output, shape index: {}]
  %s4 = sld [smem:[#allocation0]]
  $region45: #{upscale_forward.1} parent=0
    _
  %s6 = ssub.s32 1, %s4
  %s7 = scalar_select 0, %s6, %s4
  loop: start=0, step=1, limit=6
  $region2: #{upscale_forward.1} parent=0 // loop_pre_header
    _
  $region3: #{upscale_forward.1} parent=0 // loop_header
    %s9 = sphi 0, %s13
    %p10 = scmp.ge.s32.totalorder %s9, 6
    %s19 = sphi 0, %s21
    %s22 = sphi 0, %s19
    %s23 = sphi 0, %s22
    %s39 = sphi 0, %s23
    %s43 = sphi 0, %s43
    %s45 = sphi 0, %s43
    %s46 = sphi 0, %s45
    %s60 = sphi 0, %s46
    %s64 = sphi 0, %s64
    %s66 = sphi 0, %s64
    %s67 = sphi 0, %s66
    %s81 = sphi 0, %s67
    %s87 = sphi 0, %s89
    %s90 = sphi 0, %s87
    %s91 = sphi 0, %s90
    %s107 = sphi 0, %s91
  $region4: #{upscale_forward.1} parent=0 // loop_header_branch
    %12 = sbr.rel (%p10) target = $region8
  $region5: #{upscale_forward.1} parent=0 // loop_body
    %s14 = ssub.s32 %s9, 1
    %s15 = ssub.s32 %s9, 2
    %s16 = sadd.s32 %s9, 1
    %s17 = ssub.s32 %s9, %s16
    %p18 = scmp.eq.s32.totalorder %s17, 0
    %s20 = sadd.s32 %s19, 1
    %s21 = scalar_select %p18, %s19, %s20
    %p24 = pneg %p18
    %p25 = scmp.eq.s32.totalorder %s9, 3
    %p26 = por %p24, %p25
    %p27 = scmp.ne.s32.totalorder %s19, %s22
    %p28 = scmp.eq.s32.totalorder %s9, 0
    %p29 = por %p27, %p28
    %p30 = scmp.ne.s32.totalorder %s19, %s22
    %p31 = scmp.eq.s32.totalorder %s14, 3
    %p32 = por %p30, %p31
    %p33 = scmp.ne.s32.totalorder %s22, %s23
    %p34 = scmp.eq.s32.totalorder %s14, 0
    %p35 = por %p33, %p34
    %p36 = scmp.ne.s32.totalorder %s22, %s23
    %p37 = scmp.eq.s32.totalorder %s15, 3
    %p38 = por %p36, %p37
    %p40 = scmp.ne.s32.totalorder %s23, %s39
    %p41 = scmp.eq.s32.totalorder %s15, 0
    %p42 = por %p40, %p41
    %s44 = sadd.s32 %s43, 1
    %p47 = scmp.eq.s32.totalorder %s9, 3
    %p48 = scmp.ne.s32.totalorder %s43, %s45
    %p49 = scmp.eq.s32.totalorder %s9, 0
    %p50 = por %p48, %p49
    %p51 = scmp.ne.s32.totalorder %s43, %s45
    %p52 = scmp.eq.s32.totalorder %s14, 3
    %p53 = por %p51, %p52
    %p54 = scmp.ne.s32.totalorder %s45, %s46
    %p55 = scmp.eq.s32.totalorder %s14, 0
    %p56 = por %p54, %p55
    %p57 = scmp.ne.s32.totalorder %s45, %s46
    %p58 = scmp.eq.s32.totalorder %s15, 3
    %p59 = por %p57, %p58
    %p61 = scmp.ne.s32.totalorder %s46, %s60
    %p62 = scmp.eq.s32.totalorder %s15, 0
    %p63 = por %p61, %p62
    %s65 = sadd.s32 %s64, 1
    %p68 = scmp.eq.s32.totalorder %s9, 3
    %p69 = scmp.ne.s32.totalorder %s64, %s66
    %p70 = scmp.eq.s32.totalorder %s9, 0
    %p71 = por %p69, %p70
    %p72 = scmp.ne.s32.totalorder %s64, %s66
    %p73 = scmp.eq.s32.totalorder %s14, 3
    %p74 = por %p72, %p73
    %p75 = scmp.ne.s32.totalorder %s66, %s67
    %p76 = scmp.eq.s32.totalorder %s14, 0
    %p77 = por %p75, %p76
    %p78 = scmp.ne.s32.totalorder %s66, %s67
    %p79 = scmp.eq.s32.totalorder %s15, 3
    %p80 = por %p78, %p79
    %p82 = scmp.ne.s32.totalorder %s67, %s81
    %p83 = scmp.eq.s32.totalorder %s15, 0
    %p84 = por %p82, %p83
    %s85 = ssub.s32 %s9, %s16
    %p86 = scmp.eq.s32.totalorder %s85, 0
    %s88 = sadd.s32 %s87, 1
    %s89 = scalar_select %p86, %s87, %s88
    %p92 = pneg %p86
    %p93 = scmp.eq.s32.totalorder %s9, 3
    %p94 = por %p92, %p93
    %p95 = scmp.ne.s32.totalorder %s87, %s90
    %p96 = scmp.eq.s32.totalorder %s9, 0
    %p97 = por %p95, %p96
    %p98 = scmp.ne.s32.totalorder %s87, %s90
    %p99 = scmp.eq.s32.totalorder %s14, 3
    %p100 = por %p98, %p99
    %p101 = scmp.ne.s32.totalorder %s90, %s91
    %p102 = scmp.eq.s32.totalorder %s14, 0
    %p103 = por %p101, %p102
    %p104 = scmp.ne.s32.totalorder %s90, %s91
    %p105 = scmp.eq.s32.totalorder %s15, 3
    %p106 = por %p104, %p105
    %p108 = scmp.ne.s32.totalorder %s91, %s107
    %p109 = scmp.eq.s32.totalorder %s15, 0
    %p110 = por %p108, %p109
    %p111 = scmp.le.s32.totalorder 1, %s9
    %p112 = scmp.lt.s32.totalorder %s9, 5
    %p113 = pnand %p111, %p112
    %p114 = pneg %p113
    // Predicated region
    $region9: #{upscale_forward.1} parent=5 // pred_check
      _
    $region10: #{upscale_forward.1} parent=5 // pred_check_branch
      %116 = sbr.rel (%p113) target = $region12
    $region11: #{upscale_forward.1} parent=5 // pred_region
      %s117 = ssub.s32 %s9, 1
      // Predicated region
      $region13: #{upscale_forward.1} parent=11 // pred_check
        %p118 = pneg %p56
      $region14: #{upscale_forward.1} parent=11 // pred_check_branch
        %120 = sbr.rel (%p118) target = $region16
      $region15: #{upscale_forward.1} parent=11 // pred_region
        _
      $region16: #{upscale_forward.1} parent=11 // pred_fallthru
        _
      // Predicated region
      $region17: #{upscale_forward.1} parent=11 // pred_check
        %p121 = pneg %p77
      $region18: #{upscale_forward.1} parent=11 // pred_check_branch
        %123 = sbr.rel (%p121) target = $region20
      $region19: #{upscale_forward.1} parent=11 // pred_region
        _
      $region20: #{upscale_forward.1} parent=11 // pred_fallthru
        _
    $region12: #{upscale_forward.1} parent=5 // pred_fallthru
      _
    %p124 = scmp.lt.s32.totalorder %s9, 4
    // Predicated region
    $region21: #{upscale_forward.1} parent=5 // pred_check
      %p125 = pneg %p124
    $region22: #{upscale_forward.1} parent=5 // pred_check_branch
      %127 = sbr.rel (%p125) target = $region24
    $region23: #{upscale_forward.1} parent=5 // pred_region
      // Predicated region
      $region25: #{upscale_forward.1} parent=23 // pred_check
        %p128 = pneg %p29
      $region26: #{upscale_forward.1} parent=23 // pred_check_branch
        %130 = sbr.rel (%p128) target = $region28
      $region27: #{upscale_forward.1} parent=23 // pred_region
        %s131 = smul.u32 64, %s9
        %p132 = scmp.lt.s32.totalorder %s131, 255
        %s133 = scalar_select %p132, %s131, 255
        %s134 = smul.addr %s133, 4
        %s135 = scalar_lea.vmem %s0, %s134
        %s136 = smul.u32 64, %s9
      $region28: #{upscale_forward.1} parent=23 // pred_fallthru
        _
    $region24: #{upscale_forward.1} parent=5 // pred_fallthru
      _
    %p137 = scmp.le.s32.totalorder 1, %s9
    %p138 = scmp.lt.s32.totalorder %s9, 5
    %p139 = pnand %p137, %p138
    %p140 = pneg %p139
    // Predicated region
    $region29: #{upscale_forward.1} parent=5 // pred_check
      _
    $region30: #{upscale_forward.1} parent=5 // pred_check_branch
      %142 = sbr.rel (%p139) target = $region32
    $region31: #{upscale_forward.1} parent=5 // pred_region
      %s143 = ssub.s32 %s9, 1
      %s144 = smul.u32 64, %s14
      %p145 = scmp.lt.s32.totalorder %s144, 255
      %s146 = scalar_select %p145, %s144, 255
      %s147 = smul.addr %s146, 4
      %s148 = scalar_lea.vmem %s0, %s147
      %p149 = pneg %p35
      %p150 = pneg %p32
      %p151 = pneg %p56
      %p152 = pneg %p53
      %p153 = pneg %p77
      %p154 = pneg %p74
      %p155 = pneg %p103
      %p156 = pneg %p100
      %s157 = smul.u32 64, %s14
      %p158 = scmp.lt.s32.totalorder %s157, 255
      %s159 = scalar_select %p158, %s157, 255
      %s160 = smul.addr %s159, 8
      %s161 = scalar_lea.vmem %s3, %s160
      %s162 = smul.u32 64, %s14
      %p163 = scmp.lt.s32.totalorder %s162, 255
      %s164 = scalar_select %p163, %s162, 255
      %s165 = smul.addr %s164, 4
      %s166 = scalar_lea.vmem %s0, %s165
      %s167 = smul.u32 64, %s14
      %s168 = smul.u32 64, %s14
      %p169 = scmp.lt.s32.totalorder %s168, 255
      %s170 = scalar_select %p169, %s168, 255
      %s171 = smul.addr %s170, 8
      %s172 = scalar_lea.vmem %s3, %s171
      %s173 = smul.u32 64, %s14
      %v175 = vld [vmem:[%s166] sm:$0xf]
      %v176 = vld [vmem:[%s166 + $0x4] sm:$0xf]
      %v177 = vld [vmem:[%s166 + $0x8] sm:$0xf]
      %v178 = vld [vmem:[%s166 + $0xc] sm:$0xf]
      %v179 = vld [vmem:[%s166 + $0x10] sm:$0xf]
      %v180 = vld [vmem:[%s166 + $0x14] sm:$0xf]
      %v181 = vld [vmem:[%s166 + $0x18] sm:$0xf]
      %v182 = vld [vmem:[%s166 + $0x1c] sm:$0xf]
      %v183 = vld [vmem:[%s166 + $0x20] sm:$0xf]
      %v184 = vld [vmem:[%s166 + $0x24] sm:$0xf]
      %v185 = vld [vmem:[%s166 + $0x28] sm:$0xf]
      %v186 = vld [vmem:[%s166 + $0x2c] sm:$0xf]
      %v187 = vld [vmem:[%s166 + $0x30] sm:$0xf]
      %v188 = vld [vmem:[%s166 + $0x34] sm:$0xf]
      %v189 = vld [vmem:[%s166 + $0x38] sm:$0xf]
      %v190 = vld [vmem:[%s166 + $0x3c] sm:$0xf]
      %v191 = vld [vmem:[%s166 + $0x40] sm:$0xf]
      %v192 = vld [vmem:[%s166 + $0x44] sm:$0xf]
      %v193 = vld [vmem:[%s166 + $0x48] sm:$0xf]
      %v194 = vld [vmem:[%s166 + $0x4c] sm:$0xf]
      %v195 = vld [vmem:[%s166 + $0x50] sm:$0xf]
      %v196 = vld [vmem:[%s166 + $0x54] sm:$0xf]
      %v197 = vld [vmem:[%s166 + $0x58] sm:$0xf]
      %v198 = vld [vmem:[%s166 + $0x5c] sm:$0xf]
      %v199 = vld [vmem:[%s166 + $0x60] sm:$0xf]
      %v200 = vld [vmem:[%s166 + $0x64] sm:$0xf]
      %v201 = vld [vmem:[%s166 + $0x68] sm:$0xf]
      %v202 = vld [vmem:[%s166 + $0x6c] sm:$0xf]
      %v203 = vld [vmem:[%s166 + $0x70] sm:$0xf]
      %v204 = vld [vmem:[%s166 + $0x74] sm:$0xf]
      %v205 = vld [vmem:[%s166 + $0x78] sm:$0xf]
      %v206 = vld [vmem:[%s166 + $0x7c] sm:$0xf]
      %v207 = vld [vmem:[%s166 + $0x80] sm:$0xf]
      %v208 = vld [vmem:[%s166 + $0x84] sm:$0xf]
      %v209 = vld [vmem:[%s166 + $0x88] sm:$0xf]
      %v210 = vld [vmem:[%s166 + $0x8c] sm:$0xf]
      %v211 = vld [vmem:[%s166 + $0x90] sm:$0xf]
      %v212 = vld [vmem:[%s166 + $0x94] sm:$0xf]
      %v213 = vld [vmem:[%s166 + $0x98] sm:$0xf]
      %v214 = vld [vmem:[%s166 + $0x9c] sm:$0xf]
      %v215 = vld [vmem:[%s166 + $0xa0] sm:$0xf]
      %v216 = vld [vmem:[%s166 + $0xa4] sm:$0xf]
      %v217 = vld [vmem:[%s166 + $0xa8] sm:$0xf]
      %v218 = vld [vmem:[%s166 + $0xac] sm:$0xf]
      %v219 = vld [vmem:[%s166 + $0xb0] sm:$0xf]
      %v220 = vld [vmem:[%s166 + $0xb4] sm:$0xf]
      %v221 = vld [vmem:[%s166 + $0xb8] sm:$0xf]
      %v222 = vld [vmem:[%s166 + $0xbc] sm:$0xf]
      %v223 = vld [vmem:[%s166 + $0xc0] sm:$0xf]
      %v224 = vld [vmem:[%s166 + $0xc4] sm:$0xf]
      %v225 = vld [vmem:[%s166 + $0xc8] sm:$0xf]
      %v226 = vld [vmem:[%s166 + $0xcc] sm:$0xf]
      %v227 = vld [vmem:[%s166 + $0xd0] sm:$0xf]
      %v228 = vld [vmem:[%s166 + $0xd4] sm:$0xf]
      %v229 = vld [vmem:[%s166 + $0xd8] sm:$0xf]
      %v230 = vld [vmem:[%s166 + $0xdc] sm:$0xf]
      %v231 = vld [vmem:[%s166 + $0xe0] sm:$0xf]
      %v232 = vld [vmem:[%s166 + $0xe4] sm:$0xf]
      %v233 = vld [vmem:[%s166 + $0xe8] sm:$0xf]
      %v234 = vld [vmem:[%s166 + $0xec] sm:$0xf]
      %v235 = vld [vmem:[%s166 + $0xf0] sm:$0xf]
      %v236 = vld [vmem:[%s166 + $0xf4] sm:$0xf]
      %v237 = vld [vmem:[%s166 + $0xf8] sm:$0xf]
      %v238 = vld [vmem:[%s166 + $0xfc] sm:$0xf]
      %v239 = vld [vmem:[%s1] sm:$0xf]
      %v240 = vld [vmem:[%s1 + $0x4] sm:$0xf]
      %v241 = vld [vmem:[%s1 + $0x8] sm:$0xf]
      %v242 = vld [vmem:[%s1 + $0xc] sm:$0xf]
      %v243 = vld [vmem:[%s1 + $0x10] sm:$0xf]
      %v244 = vld [vmem:[%s1 + $0x14] sm:$0xf]
      %v245 = vld [vmem:[%s1 + $0x18] sm:$0xf]
      %v246 = vld [vmem:[%s1 + $0x1c] sm:$0xf]
      %v247 = vld [vmem:[%s1 + $0x20] sm:$0xf]
      %v248 = vld [vmem:[%s1 + $0x24] sm:$0xf]
      %v249 = vld [vmem:[%s1 + $0x28] sm:$0xf]
      %v250 = vld [vmem:[%s1 + $0x2c] sm:$0xf]
      %v251 = vld [vmem:[%s1 + $0x30] sm:$0xf]
      %v252 = vld [vmem:[%s1 + $0x34] sm:$0xf]
      %v253 = vld [vmem:[%s1 + $0x38] sm:$0xf]
      %v254 = vld [vmem:[%s1 + $0x3c] sm:$0xf]
      %v255 = vld [vmem:[%s2] sm:$0x1]
      %v257 = vlaneseq
      %v258 = vshrl.u32 %v257, 7
      %v259 = vsub.s32 0, %v258
      %v260 = vrot.slane %v255, %v259
      %v326 = vunpack.c.l.b16 %v175
      %v327 = vunpack.c.l.b16 %v176
      %v328 = vunpack.c.l.b16 %v177
      %v329 = vunpack.c.l.b16 %v178
      %v330 = vunpack.c.l.b16 %v179
      %v331 = vunpack.c.l.b16 %v180
      %v332 = vunpack.c.l.b16 %v181
      %v333 = vunpack.c.l.b16 %v182
      %v334 = vunpack.c.l.b16 %v183
      %v335 = vunpack.c.l.b16 %v184
      %v336 = vunpack.c.l.b16 %v185
      %v337 = vunpack.c.l.b16 %v186
      %v338 = vunpack.c.l.b16 %v187
      %v339 = vunpack.c.l.b16 %v188
      %v340 = vunpack.c.l.b16 %v189
      %v341 = vunpack.c.l.b16 %v190
      %v342 = vunpack.c.l.b16 %v191
      %v343 = vunpack.c.l.b16 %v192
      %v344 = vunpack.c.l.b16 %v193
      %v345 = vunpack.c.l.b16 %v194
      %v346 = vunpack.c.l.b16 %v195
      %v347 = vunpack.c.l.b16 %v196
      %v348 = vunpack.c.l.b16 %v197
      %v349 = vunpack.c.l.b16 %v198
      %v350 = vunpack.c.l.b16 %v199
      %v351 = vunpack.c.l.b16 %v200
      %v352 = vunpack.c.l.b16 %v201
      %v353 = vunpack.c.l.b16 %v202
      %v354 = vunpack.c.l.b16 %v203
      %v355 = vunpack.c.l.b16 %v204
      %v356 = vunpack.c.l.b16 %v205
      %v357 = vunpack.c.l.b16 %v206
      %v358 = vunpack.c.l.b16 %v207
      %v359 = vunpack.c.l.b16 %v208
      %v360 = vunpack.c.l.b16 %v209
      %v361 = vunpack.c.l.b16 %v210
      %v362 = vunpack.c.l.b16 %v211
      %v363 = vunpack.c.l.b16 %v212
      %v364 = vunpack.c.l.b16 %v213
      %v365 = vunpack.c.l.b16 %v214
      %v366 = vunpack.c.l.b16 %v215
      %v367 = vunpack.c.l.b16 %v216
      %v368 = vunpack.c.l.b16 %v217
      %v369 = vunpack.c.l.b16 %v218
      %v370 = vunpack.c.l.b16 %v219
      %v371 = vunpack.c.l.b16 %v220
      %v372 = vunpack.c.l.b16 %v221
      %v373 = vunpack.c.l.b16 %v222
      %v374 = vunpack.c.l.b16 %v223
      %v375 = vunpack.c.l.b16 %v224
      %v376 = vunpack.c.l.b16 %v225
      %v377 = vunpack.c.l.b16 %v226
      %v378 = vunpack.c.l.b16 %v227
      %v379 = vunpack.c.l.b16 %v228
      %v380 = vunpack.c.l.b16 %v229
      %v381 = vunpack.c.l.b16 %v230
      %v382 = vunpack.c.l.b16 %v231
      %v383 = vunpack.c.l.b16 %v232
      %v384 = vunpack.c.l.b16 %v233
      %v385 = vunpack.c.l.b16 %v234
      %v386 = vunpack.c.l.b16 %v235
      %v387 = vunpack.c.l.b16 %v236
      %v388 = vunpack.c.l.b16 %v237
      %v389 = vunpack.c.l.b16 %v238
      %v390 = vpack.c.b16 %v327, %v326
      %v391 = vpack.c.b16 %v329, %v328
      %v392 = vpack.c.b16 %v331, %v330
      %v393 = vpack.c.b16 %v333, %v332
      %v394 = vpack.c.b16 %v335, %v334
      %v395 = vpack.c.b16 %v337, %v336
      %v396 = vpack.c.b16 %v339, %v338
      %v397 = vpack.c.b16 %v341, %v340
      %v398 = vpack.c.b16 %v343, %v342
      %v399 = vpack.c.b16 %v345, %v344
      %v400 = vpack.c.b16 %v347, %v346
      %v401 = vpack.c.b16 %v349, %v348
      %v402 = vpack.c.b16 %v351, %v350
      %v403 = vpack.c.b16 %v353, %v352
      %v404 = vpack.c.b16 %v355, %v354
      %v405 = vpack.c.b16 %v357, %v356
      %v406 = vpack.c.b16 %v359, %v358
      %v407 = vpack.c.b16 %v361, %v360
      %v408 = vpack.c.b16 %v363, %v362
      %v409 = vpack.c.b16 %v365, %v364
      %v410 = vpack.c.b16 %v367, %v366
      %v411 = vpack.c.b16 %v369, %v368
      %v412 = vpack.c.b16 %v371, %v370
      %v413 = vpack.c.b16 %v373, %v372
      %v414 = vpack.c.b16 %v375, %v374
      %v415 = vpack.c.b16 %v377, %v376
      %v416 = vpack.c.b16 %v379, %v378
      %v417 = vpack.c.b16 %v381, %v380
      %v418 = vpack.c.b16 %v383, %v382
      %v419 = vpack.c.b16 %v385, %v384
      %v420 = vpack.c.b16 %v387, %v386
      %v421 = vpack.c.b16 %v389, %v388
      %v470 = vunpack.c.l.b16 %v239
      %v471 = vunpack.c.l.b16 %v240
      %v472 = vunpack.c.l.b16 %v241
      %v473 = vunpack.c.l.b16 %v242
      %v474 = vunpack.c.l.b16 %v243
      %v475 = vunpack.c.l.b16 %v244
      %v476 = vunpack.c.l.b16 %v245
      %v477 = vunpack.c.l.b16 %v246
      %v478 = vunpack.c.l.b16 %v247
      %v479 = vunpack.c.l.b16 %v248
      %v480 = vunpack.c.l.b16 %v249
      %v481 = vunpack.c.l.b16 %v250
      %v482 = vunpack.c.l.b16 %v251
      %v483 = vunpack.c.l.b16 %v252
      %v484 = vunpack.c.l.b16 %v253
      %v485 = vunpack.c.l.b16 %v254
      %v486 = vpack.c.b16 %v471, %v470
      %v487 = vpack.c.b16 %v473, %v472
      %v488 = vpack.c.b16 %v475, %v474
      %v489 = vpack.c.b16 %v477, %v476
      %v490 = vpack.c.b16 %v479, %v478
      %v491 = vpack.c.b16 %v481, %v480
      %v492 = vpack.c.b16 %v483, %v482
      %v493 = vpack.c.b16 %v485, %v484
      %502 = vmatprep.subr.bf16.mxu0 0
      %503 = vmatpush1.bf16.msra.mxu0 %v493
      %504 = vmatprep.subr.bf16.mxu0 0
      %505 = vmatpush1.bf16.msra.mxu0 %v492
      %506 = vmatprep.subr.bf16.mxu0 0
      %507 = vmatpush1.bf16.msra.mxu0 %v491
      %508 = vmatprep.subr.bf16.mxu0 0
      %509 = vmatpush1.bf16.msra.mxu0 %v490
      %510 = vmatprep.subr.bf16.mxu0 0
      %511 = vmatpush1.bf16.msra.mxu0 %v489
      %512 = vmatprep.subr.bf16.mxu0 0
      %513 = vmatpush1.bf16.msra.mxu0 %v488
      %514 = vmatprep.subr.bf16.mxu0 0
      %515 = vmatpush1.bf16.msra.mxu0 %v487
      %516 = vmatprep.subr.bf16.mxu0 0
      %517 = vmatpush1.bf16.msra.mxu0 %v486
      %518 = vmatprep.subr.bf16.mxu0 0
      %519 = vmatpush2.bf16.msra.mxu0 0
      %520 = vmatprep.subr.bf16.mxu0 0
      %521 = vmatpush2.bf16.msra.mxu0 0
      %522 = vmatprep.subr.bf16.mxu0 0
      %523 = vmatpush2.bf16.msra.mxu0 0
      %524 = vmatprep.subr.bf16.mxu0 0
      %525 = vmatpush2.bf16.msra.mxu0 0
      %526 = vmatprep.subr.bf16.mxu0 0
      %527 = vmatpush2.bf16.msra.mxu0 0
      %528 = vmatprep.subr.bf16.mxu0 0
      %529 = vmatpush2.bf16.msra.mxu0 0
      %530 = vmatprep.subr.bf16.mxu0 0
      %531 = vmatpush2.bf16.msra.mxu0 0
      %532 = vmatprep.subr.bf16.mxu0 0
      %533 = vmatpush2.bf16.msra.mxu0 0
      %534 = vmatprep.mubr.bf16.mxu0 0
      %535 = vmatmul.mubr.bf16.gmra.mxu0 %v390
      %v536 = vpop.f32.mrf.mxu0
      %v537 = vadd.f32 %v260, %v536
      %v538 = vpop.f32.mrf.mxu0
      %v539 = vpop.f32.mrf.mxu0
      %v540 = vadd.f32 %v260, %v539
      %v541 = vpop.f32.mrf.mxu0
      %542 = vmatprep.mubr.bf16.mxu0 0
      %543 = vmatmul.mubr.bf16.gmra.mxu0 %v391
      %v544 = vpop.f32.mrf.mxu0
      %v545 = vadd.f32 %v260, %v544
      %v546 = vpop.f32.mrf.mxu0
      %v547 = vpop.f32.mrf.mxu0
      %v548 = vadd.f32 %v260, %v547
      %v549 = vpop.f32.mrf.mxu0
      %550 = vmatprep.mubr.bf16.mxu0 0
      %551 = vmatmul.mubr.bf16.gmra.mxu0 %v392
      %v552 = vpop.f32.mrf.mxu0
      %v553 = vadd.f32 %v260, %v552
      %v554 = vpop.f32.mrf.mxu0
      %v555 = vpop.f32.mrf.mxu0
      %v556 = vadd.f32 %v260, %v555
      %v557 = vpop.f32.mrf.mxu0
      %558 = vmatprep.mubr.bf16.mxu0 0
      %559 = vmatmul.mubr.bf16.gmra.mxu0 %v393
      %v560 = vpop.f32.mrf.mxu0
      %v561 = vadd.f32 %v260, %v560
      %v562 = vpop.f32.mrf.mxu0
      %v563 = vpop.f32.mrf.mxu0
      %v564 = vadd.f32 %v260, %v563
      %v565 = vpop.f32.mrf.mxu0
      %566 = vmatprep.mubr.bf16.mxu0 0
      %567 = vmatmul.mubr.bf16.gmra.mxu0 %v394
      %v568 = vpop.f32.mrf.mxu0
      %v569 = vadd.f32 %v260, %v568
      %v570 = vpop.f32.mrf.mxu0
      %v571 = vpop.f32.mrf.mxu0
      %v572 = vadd.f32 %v260, %v571
      %v573 = vpop.f32.mrf.mxu0
      %574 = vmatprep.mubr.bf16.mxu0 0
      %575 = vmatmul.mubr.bf16.gmra.mxu0 %v395
      %v576 = vpop.f32.mrf.mxu0
      %v577 = vadd.f32 %v260, %v576
      %v578 = vpop.f32.mrf.mxu0
      %v579 = vpop.f32.mrf.mxu0
      %v580 = vadd.f32 %v260, %v579
      %v581 = vpop.f32.mrf.mxu0
      %582 = vmatprep.mubr.bf16.mxu0 0
      %583 = vmatmul.mubr.bf16.gmra.mxu0 %v396
      %v584 = vpop.f32.mrf.mxu0
      %v585 = vadd.f32 %v260, %v584
      %v586 = vpop.f32.mrf.mxu0
      %v587 = vpop.f32.mrf.mxu0
      %v588 = vadd.f32 %v260, %v587
      %v589 = vpop.f32.mrf.mxu0
      %590 = vmatprep.mubr.bf16.mxu0 0
      %591 = vmatmul.mubr.bf16.gmra.mxu0 %v397
      %v592 = vpop.f32.mrf.mxu0
      %v593 = vadd.f32 %v260, %v592
      %v594 = vpop.f32.mrf.mxu0
      %v595 = vpop.f32.mrf.mxu0
      %v596 = vadd.f32 %v260, %v595
      %v597 = vpop.f32.mrf.mxu0
      %598 = vmatprep.mubr.bf16.mxu0 0
      %599 = vmatmul.mubr.bf16.gmra.mxu0 %v398
      %v600 = vpop.f32.mrf.mxu0
      %v601 = vadd.f32 %v260, %v600
      %v602 = vpop.f32.mrf.mxu0
      %v603 = vpop.f32.mrf.mxu0
      %v604 = vadd.f32 %v260, %v603
      %v605 = vpop.f32.mrf.mxu0
      %606 = vmatprep.mubr.bf16.mxu0 0
      %607 = vmatmul.mubr.bf16.gmra.mxu0 %v399
      %v608 = vpop.f32.mrf.mxu0
      %v609 = vadd.f32 %v260, %v608
      %v610 = vpop.f32.mrf.mxu0
      %v611 = vpop.f32.mrf.mxu0
      %v612 = vadd.f32 %v260, %v611
      %v613 = vpop.f32.mrf.mxu0
      %614 = vmatprep.mubr.bf16.mxu0 0
      %615 = vmatmul.mubr.bf16.gmra.mxu0 %v400
      %v616 = vpop.f32.mrf.mxu0
      %v617 = vadd.f32 %v260, %v616
      %v618 = vpop.f32.mrf.mxu0
      %v619 = vpop.f32.mrf.mxu0
      %v620 = vadd.f32 %v260, %v619
      %v621 = vpop.f32.mrf.mxu0
      %622 = vmatprep.mubr.bf16.mxu0 0
      %623 = vmatmul.mubr.bf16.gmra.mxu0 %v401
      %v624 = vpop.f32.mrf.mxu0
      %v625 = vadd.f32 %v260, %v624
      %v626 = vpop.f32.mrf.mxu0
      %v627 = vpop.f32.mrf.mxu0
      %v628 = vadd.f32 %v260, %v627
      %v629 = vpop.f32.mrf.mxu0
      %630 = vmatprep.mubr.bf16.mxu0 0
      %631 = vmatmul.mubr.bf16.gmra.mxu0 %v402
      %v632 = vpop.f32.mrf.mxu0
      %v633 = vadd.f32 %v260, %v632
      %v634 = vpop.f32.mrf.mxu0
      %v635 = vpop.f32.mrf.mxu0
      %v636 = vadd.f32 %v260, %v635
      %v637 = vpop.f32.mrf.mxu0
      %638 = vmatprep.mubr.bf16.mxu0 0
      %639 = vmatmul.mubr.bf16.gmra.mxu0 %v403
      %v640 = vpop.f32.mrf.mxu0
      %v641 = vadd.f32 %v260, %v640
      %v642 = vpop.f32.mrf.mxu0
      %v643 = vpop.f32.mrf.mxu0
      %v644 = vadd.f32 %v260, %v643
      %v645 = vpop.f32.mrf.mxu0
      %646 = vmatprep.mubr.bf16.mxu0 0
      %647 = vmatmul.mubr.bf16.gmra.mxu0 %v404
      %v648 = vpop.f32.mrf.mxu0
      %v649 = vadd.f32 %v260, %v648
      %v650 = vpop.f32.mrf.mxu0
      %v651 = vpop.f32.mrf.mxu0
      %v652 = vadd.f32 %v260, %v651
      %v653 = vpop.f32.mrf.mxu0
      %654 = vmatprep.mubr.bf16.mxu0 0
      %655 = vmatmul.mubr.bf16.gmra.mxu0 %v405
      %v656 = vpop.f32.mrf.mxu0
      %v657 = vadd.f32 %v260, %v656
      %v658 = vpop.f32.mrf.mxu0
      %v659 = vpop.f32.mrf.mxu0
      %v660 = vadd.f32 %v260, %v659
      %v661 = vpop.f32.mrf.mxu0
      %662 = vmatprep.mubr.bf16.mxu0 0
      %663 = vmatmul.mubr.bf16.gmra.mxu0 %v406
      %v664 = vpop.f32.mrf.mxu0
      %v665 = vadd.f32 %v260, %v664
      %v666 = vpop.f32.mrf.mxu0
      %v667 = vpop.f32.mrf.mxu0
      %v668 = vadd.f32 %v260, %v667
      %v669 = vpop.f32.mrf.mxu0
      %670 = vmatprep.mubr.bf16.mxu0 0
      %671 = vmatmul.mubr.bf16.gmra.mxu0 %v407
      %v672 = vpop.f32.mrf.mxu0
      %v673 = vadd.f32 %v260, %v672
      %v674 = vpop.f32.mrf.mxu0
      %v675 = vpop.f32.mrf.mxu0
      %v676 = vadd.f32 %v260, %v675
      %v677 = vpop.f32.mrf.mxu0
      %678 = vmatprep.mubr.bf16.mxu0 0
      %679 = vmatmul.mubr.bf16.gmra.mxu0 %v408
      %v680 = vpop.f32.mrf.mxu0
      %v681 = vadd.f32 %v260, %v680
      %v682 = vpop.f32.mrf.mxu0
      %v683 = vpop.f32.mrf.mxu0
      %v684 = vadd.f32 %v260, %v683
      %v685 = vpop.f32.mrf.mxu0
      %686 = vmatprep.mubr.bf16.mxu0 0
      %687 = vmatmul.mubr.bf16.gmra.mxu0 %v409
      %v688 = vpop.f32.mrf.mxu0
      %v689 = vadd.f32 %v260, %v688
      %v690 = vpop.f32.mrf.mxu0
      %v691 = vpop.f32.mrf.mxu0
      %v692 = vadd.f32 %v260, %v691
      %v693 = vpop.f32.mrf.mxu0
      %694 = vmatprep.mubr.bf16.mxu0 0
      %695 = vmatmul.mubr.bf16.gmra.mxu0 %v410
      %v696 = vpop.f32.mrf.mxu0
      %v697 = vadd.f32 %v260, %v696
      %v698 = vpop.f32.mrf.mxu0
      %v699 = vpop.f32.mrf.mxu0
      %v700 = vadd.f32 %v260, %v699
      %v701 = vpop.f32.mrf.mxu0
      %702 = vmatprep.mubr.bf16.mxu0 0
      %703 = vmatmul.mubr.bf16.gmra.mxu0 %v411
      %v704 = vpop.f32.mrf.mxu0
      %v705 = vadd.f32 %v260, %v704
      %v706 = vpop.f32.mrf.mxu0
      %v707 = vpop.f32.mrf.mxu0
      %v708 = vadd.f32 %v260, %v707
      %v709 = vpop.f32.mrf.mxu0
      %710 = vmatprep.mubr.bf16.mxu0 0
      %711 = vmatmul.mubr.bf16.gmra.mxu0 %v412
      %v712 = vpop.f32.mrf.mxu0
      %v713 = vadd.f32 %v260, %v712
      %v714 = vpop.f32.mrf.mxu0
      %v715 = vpop.f32.mrf.mxu0
      %v716 = vadd.f32 %v260, %v715
      %v717 = vpop.f32.mrf.mxu0
      %718 = vmatprep.mubr.bf16.mxu0 0
      %719 = vmatmul.mubr.bf16.gmra.mxu0 %v413
      %v720 = vpop.f32.mrf.mxu0
      %v721 = vadd.f32 %v260, %v720
      %v722 = vpop.f32.mrf.mxu0
      %v723 = vpop.f32.mrf.mxu0
      %v724 = vadd.f32 %v260, %v723
      %v725 = vpop.f32.mrf.mxu0
      %726 = vmatprep.mubr.bf16.mxu0 0
      %727 = vmatmul.mubr.bf16.gmra.mxu0 %v414
      %v728 = vpop.f32.mrf.mxu0
      %v729 = vadd.f32 %v260, %v728
      %v730 = vpop.f32.mrf.mxu0
      %v731 = vpop.f32.mrf.mxu0
      %v732 = vadd.f32 %v260, %v731
      %v733 = vpop.f32.mrf.mxu0
      %734 = vmatprep.mubr.bf16.mxu0 0
      %735 = vmatmul.mubr.bf16.gmra.mxu0 %v415
      %v736 = vpop.f32.mrf.mxu0
      %v737 = vadd.f32 %v260, %v736
      %v738 = vpop.f32.mrf.mxu0
      %v739 = vpop.f32.mrf.mxu0
      %v740 = vadd.f32 %v260, %v739
      %v741 = vpop.f32.mrf.mxu0
      %742 = vmatprep.mubr.bf16.mxu0 0
      %743 = vmatmul.mubr.bf16.gmra.mxu0 %v416
      %v744 = vpop.f32.mrf.mxu0
      %v745 = vadd.f32 %v260, %v744
      %v746 = vpop.f32.mrf.mxu0
      %v747 = vpop.f32.mrf.mxu0
      %v748 = vadd.f32 %v260, %v747
      %v749 = vpop.f32.mrf.mxu0
      %750 = vmatprep.mubr.bf16.mxu0 0
      %751 = vmatmul.mubr.bf16.gmra.mxu0 %v417
      %v752 = vpop.f32.mrf.mxu0
      %v753 = vadd.f32 %v260, %v752
      %v754 = vpop.f32.mrf.mxu0
      %v755 = vpop.f32.mrf.mxu0
      %v756 = vadd.f32 %v260, %v755
      %v757 = vpop.f32.mrf.mxu0
      %758 = vmatprep.mubr.bf16.mxu0 0
      %759 = vmatmul.mubr.bf16.gmra.mxu0 %v418
      %v760 = vpop.f32.mrf.mxu0
      %v761 = vadd.f32 %v260, %v760
      %v762 = vpop.f32.mrf.mxu0
      %v763 = vpop.f32.mrf.mxu0
      %v764 = vadd.f32 %v260, %v763
      %v765 = vpop.f32.mrf.mxu0
      %766 = vmatprep.mubr.bf16.mxu0 0
      %767 = vmatmul.mubr.bf16.gmra.mxu0 %v419
      %v768 = vpop.f32.mrf.mxu0
      %v769 = vadd.f32 %v260, %v768
      %v770 = vpop.f32.mrf.mxu0
      %v771 = vpop.f32.mrf.mxu0
      %v772 = vadd.f32 %v260, %v771
      %v773 = vpop.f32.mrf.mxu0
      %774 = vmatprep.mubr.bf16.mxu0 0
      %775 = vmatmul.mubr.bf16.gmra.mxu0 %v420
      %v776 = vpop.f32.mrf.mxu0
      %v777 = vadd.f32 %v260, %v776
      %v778 = vpop.f32.mrf.mxu0
      %v779 = vpop.f32.mrf.mxu0
      %v780 = vadd.f32 %v260, %v779
      %v781 = vpop.f32.mrf.mxu0
      %782 = vmatprep.mubr.bf16.mxu0 0
      %783 = vmatmul.mubr.bf16.gmra.mxu0 %v421
      %v784 = vpop.f32.mrf.mxu0
      %v785 = vadd.f32 %v260, %v784
      %v786 = vpop.f32.mrf.mxu0
      %v787 = vpop.f32.mrf.mxu0
      %v788 = vadd.f32 %v260, %v787
      %v789 = vpop.f32.mrf.mxu0
      %790 = vdwg.mxu0
      %vm791 = vcmp.ge.f32.partialorder %v537, 0.0
      %vm792 = vcmp.ge.f32.partialorder %v540, 0.0
      %vm793 = vcmp.ge.f32.partialorder %v545, 0.0
      %vm794 = vcmp.ge.f32.partialorder %v548, 0.0
      %vm795 = vcmp.ge.f32.partialorder %v553, 0.0
      %vm796 = vcmp.ge.f32.partialorder %v556, 0.0
      %vm797 = vcmp.ge.f32.partialorder %v561, 0.0
      %vm798 = vcmp.ge.f32.partialorder %v564, 0.0
      %vm799 = vcmp.ge.f32.partialorder %v569, 0.0
      %vm800 = vcmp.ge.f32.partialorder %v572, 0.0
      %vm801 = vcmp.ge.f32.partialorder %v577, 0.0
      %vm802 = vcmp.ge.f32.partialorder %v580, 0.0
      %vm803 = vcmp.ge.f32.partialorder %v585, 0.0
      %vm804 = vcmp.ge.f32.partialorder %v588, 0.0
      %vm805 = vcmp.ge.f32.partialorder %v593, 0.0
      %vm806 = vcmp.ge.f32.partialorder %v596, 0.0
      %vm807 = vcmp.ge.f32.partialorder %v601, 0.0
      %vm808 = vcmp.ge.f32.partialorder %v604, 0.0
      %vm809 = vcmp.ge.f32.partialorder %v609, 0.0
      %vm810 = vcmp.ge.f32.partialorder %v612, 0.0
      %vm811 = vcmp.ge.f32.partialorder %v617, 0.0
      %vm812 = vcmp.ge.f32.partialorder %v620, 0.0
      %vm813 = vcmp.ge.f32.partialorder %v625, 0.0
      %vm814 = vcmp.ge.f32.partialorder %v628, 0.0
      %vm815 = vcmp.ge.f32.partialorder %v633, 0.0
      %vm816 = vcmp.ge.f32.partialorder %v636, 0.0
      %vm817 = vcmp.ge.f32.partialorder %v641, 0.0
      %vm818 = vcmp.ge.f32.partialorder %v644, 0.0
      %vm819 = vcmp.ge.f32.partialorder %v649, 0.0
      %vm820 = vcmp.ge.f32.partialorder %v652, 0.0
      %vm821 = vcmp.ge.f32.partialorder %v657, 0.0
      %vm822 = vcmp.ge.f32.partialorder %v660, 0.0
      %vm823 = vcmp.ge.f32.partialorder %v665, 0.0
      %vm824 = vcmp.ge.f32.partialorder %v668, 0.0
      %vm825 = vcmp.ge.f32.partialorder %v673, 0.0
      %vm826 = vcmp.ge.f32.partialorder %v676, 0.0
      %vm827 = vcmp.ge.f32.partialorder %v681, 0.0
      %vm828 = vcmp.ge.f32.partialorder %v684, 0.0
      %vm829 = vcmp.ge.f32.partialorder %v689, 0.0
      %vm830 = vcmp.ge.f32.partialorder %v692, 0.0
      %vm831 = vcmp.ge.f32.partialorder %v697, 0.0
      %vm832 = vcmp.ge.f32.partialorder %v700, 0.0
      %vm833 = vcmp.ge.f32.partialorder %v705, 0.0
      %vm834 = vcmp.ge.f32.partialorder %v708, 0.0
      %vm835 = vcmp.ge.f32.partialorder %v713, 0.0
      %vm836 = vcmp.ge.f32.partialorder %v716, 0.0
      %vm837 = vcmp.ge.f32.partialorder %v721, 0.0
      %vm838 = vcmp.ge.f32.partialorder %v724, 0.0
      %vm839 = vcmp.ge.f32.partialorder %v729, 0.0
      %vm840 = vcmp.ge.f32.partialorder %v732, 0.0
      %vm841 = vcmp.ge.f32.partialorder %v737, 0.0
      %vm842 = vcmp.ge.f32.partialorder %v740, 0.0
      %vm843 = vcmp.ge.f32.partialorder %v745, 0.0
      %vm844 = vcmp.ge.f32.partialorder %v748, 0.0
      %vm845 = vcmp.ge.f32.partialorder %v753, 0.0
      %vm846 = vcmp.ge.f32.partialorder %v756, 0.0
      %vm847 = vcmp.ge.f32.partialorder %v761, 0.0
      %vm848 = vcmp.ge.f32.partialorder %v764, 0.0
      %vm849 = vcmp.ge.f32.partialorder %v769, 0.0
      %vm850 = vcmp.ge.f32.partialorder %v772, 0.0
      %vm851 = vcmp.ge.f32.partialorder %v777, 0.0
      %vm852 = vcmp.ge.f32.partialorder %v780, 0.0
      %vm853 = vcmp.ge.f32.partialorder %v785, 0.0
      %vm854 = vcmp.ge.f32.partialorder %v788, 0.0
      %v855 = vmul.f32 %v537, 0.2
      %v856 = vmul.f32 %v540, 0.2
      %v857 = vmul.f32 %v545, 0.2
      %v858 = vmul.f32 %v548, 0.2
      %v859 = vmul.f32 %v553, 0.2
      %v860 = vmul.f32 %v556, 0.2
      %v861 = vmul.f32 %v561, 0.2
      %v862 = vmul.f32 %v564, 0.2
      %v863 = vmul.f32 %v569, 0.2
      %v864 = vmul.f32 %v572, 0.2
      %v865 = vmul.f32 %v577, 0.2
      %v866 = vmul.f32 %v580, 0.2
      %v867 = vmul.f32 %v585, 0.2
      %v868 = vmul.f32 %v588, 0.2
      %v869 = vmul.f32 %v593, 0.2
      %v870 = vmul.f32 %v596, 0.2
      %v871 = vmul.f32 %v601, 0.2
      %v872 = vmul.f32 %v604, 0.2
      %v873 = vmul.f32 %v609, 0.2
      %v874 = vmul.f32 %v612, 0.2
      %v875 = vmul.f32 %v617, 0.2
      %v876 = vmul.f32 %v620, 0.2
      %v877 = vmul.f32 %v625, 0.2
      %v878 = vmul.f32 %v628, 0.2
      %v879 = vmul.f32 %v633, 0.2
      %v880 = vmul.f32 %v636, 0.2
      %v881 = vmul.f32 %v641, 0.2
      %v882 = vmul.f32 %v644, 0.2
      %v883 = vmul.f32 %v649, 0.2
      %v884 = vmul.f32 %v652, 0.2
      %v885 = vmul.f32 %v657, 0.2
      %v886 = vmul.f32 %v660, 0.2
      %v887 = vmul.f32 %v665, 0.2
      %v888 = vmul.f32 %v668, 0.2
      %v889 = vmul.f32 %v673, 0.2
      %v890 = vmul.f32 %v676, 0.2
      %v891 = vmul.f32 %v681, 0.2
      %v892 = vmul.f32 %v684, 0.2
      %v893 = vmul.f32 %v689, 0.2
      %v894 = vmul.f32 %v692, 0.2
      %v895 = vmul.f32 %v697, 0.2
      %v896 = vmul.f32 %v700, 0.2
      %v897 = vmul.f32 %v705, 0.2
      %v898 = vmul.f32 %v708, 0.2
      %v899 = vmul.f32 %v713, 0.2
      %v900 = vmul.f32 %v716, 0.2
      %v901 = vmul.f32 %v721, 0.2
      %v902 = vmul.f32 %v724, 0.2
      %v903 = vmul.f32 %v729, 0.2
      %v904 = vmul.f32 %v732, 0.2
      %v905 = vmul.f32 %v737, 0.2
      %v906 = vmul.f32 %v740, 0.2
      %v907 = vmul.f32 %v745, 0.2
      %v908 = vmul.f32 %v748, 0.2
      %v909 = vmul.f32 %v753, 0.2
      %v910 = vmul.f32 %v756, 0.2
      %v911 = vmul.f32 %v761, 0.2
      %v912 = vmul.f32 %v764, 0.2
      %v913 = vmul.f32 %v769, 0.2
      %v914 = vmul.f32 %v772, 0.2
      %v915 = vmul.f32 %v777, 0.2
      %v916 = vmul.f32 %v780, 0.2
      %v917 = vmul.f32 %v785, 0.2
      %v918 = vmul.f32 %v788, 0.2
      %v919 = vsel %vm791, %v537, %v855
      %v920 = vsel %vm792, %v540, %v856
      %v921 = vsel %vm793, %v545, %v857
      %v922 = vsel %vm794, %v548, %v858
      %v923 = vsel %vm795, %v553, %v859
      %v924 = vsel %vm796, %v556, %v860
      %v925 = vsel %vm797, %v561, %v861
      %v926 = vsel %vm798, %v564, %v862
      %v927 = vsel %vm799, %v569, %v863
      %v928 = vsel %vm800, %v572, %v864
      %v929 = vsel %vm801, %v577, %v865
      %v930 = vsel %vm802, %v580, %v866
      %v931 = vsel %vm803, %v585, %v867
      %v932 = vsel %vm804, %v588, %v868
      %v933 = vsel %vm805, %v593, %v869
      %v934 = vsel %vm806, %v596, %v870
      %v935 = vsel %vm807, %v601, %v871
      %v936 = vsel %vm808, %v604, %v872
      %v937 = vsel %vm809, %v609, %v873
      %v938 = vsel %vm810, %v612, %v874
      %v939 = vsel %vm811, %v617, %v875
      %v940 = vsel %vm812, %v620, %v876
      %v941 = vsel %vm813, %v625, %v877
      %v942 = vsel %vm814, %v628, %v878
      %v943 = vsel %vm815, %v633, %v879
      %v944 = vsel %vm816, %v636, %v880
      %v945 = vsel %vm817, %v641, %v881
      %v946 = vsel %vm818, %v644, %v882
      %v947 = vsel %vm819, %v649, %v883
      %v948 = vsel %vm820, %v652, %v884
      %v949 = vsel %vm821, %v657, %v885
      %v950 = vsel %vm822, %v660, %v886
      %v951 = vsel %vm823, %v665, %v887
      %v952 = vsel %vm824, %v668, %v888
      %v953 = vsel %vm825, %v673, %v889
      %v954 = vsel %vm826, %v676, %v890
      %v955 = vsel %vm827, %v681, %v891
      %v956 = vsel %vm828, %v684, %v892
      %v957 = vsel %vm829, %v689, %v893
      %v958 = vsel %vm830, %v692, %v894
      %v959 = vsel %vm831, %v697, %v895
      %v960 = vsel %vm832, %v700, %v896
      %v961 = vsel %vm833, %v705, %v897
      %v962 = vsel %vm834, %v708, %v898
      %v963 = vsel %vm835, %v713, %v899
      %v964 = vsel %vm836, %v716, %v900
      %v965 = vsel %vm837, %v721, %v901
      %v966 = vsel %vm838, %v724, %v902
      %v967 = vsel %vm839, %v729, %v903
      %v968 = vsel %vm840, %v732, %v904
      %v969 = vsel %vm841, %v737, %v905
      %v970 = vsel %vm842, %v740, %v906
      %v971 = vsel %vm843, %v745, %v907
      %v972 = vsel %vm844, %v748, %v908
      %v973 = vsel %vm845, %v753, %v909
      %v974 = vsel %vm846, %v756, %v910
      %v975 = vsel %vm847, %v761, %v911
      %v976 = vsel %vm848, %v764, %v912
      %v977 = vsel %vm849, %v769, %v913
      %v978 = vsel %vm850, %v772, %v914
      %v979 = vsel %vm851, %v777, %v915
      %v980 = vsel %vm852, %v780, %v916
      %v981 = vsel %vm853, %v785, %v917
      %v982 = vsel %vm854, %v788, %v918
      %983 = vst [vmem:[%s172] sm:$0xff] %v919
      %984 = vst [vmem:[%s172 + $0x8] sm:$0xff] %v920
      %985 = vst [vmem:[%s172 + $0x10] sm:$0xff] %v921
      %986 = vst [vmem:[%s172 + $0x18] sm:$0xff] %v922
      %987 = vst [vmem:[%s172 + $0x20] sm:$0xff] %v923
      %988 = vst [vmem:[%s172 + $0x28] sm:$0xff] %v924
      %989 = vst [vmem:[%s172 + $0x30] sm:$0xff] %v925
      %990 = vst [vmem:[%s172 + $0x38] sm:$0xff] %v926
      %991 = vst [vmem:[%s172 + $0x40] sm:$0xff] %v927
      %992 = vst [vmem:[%s172 + $0x48] sm:$0xff] %v928
      %993 = vst [vmem:[%s172 + $0x50] sm:$0xff] %v929
      %994 = vst [vmem:[%s172 + $0x58] sm:$0xff] %v930
      %995 = vst [vmem:[%s172 + $0x60] sm:$0xff] %v931
      %996 = vst [vmem:[%s172 + $0x68] sm:$0xff] %v932
      %997 = vst [vmem:[%s172 + $0x70] sm:$0xff] %v933
      %998 = vst [vmem:[%s172 + $0x78] sm:$0xff] %v934
      %999 = vst [vmem:[%s172 + $0x80] sm:$0xff] %v935
      %1000 = vst [vmem:[%s172 + $0x88] sm:$0xff] %v936
      %1001 = vst [vmem:[%s172 + $0x90] sm:$0xff] %v937
      %1002 = vst [vmem:[%s172 + $0x98] sm:$0xff] %v938
      %1003 = vst [vmem:[%s172 + $0xa0] sm:$0xff] %v939
      %1004 = vst [vmem:[%s172 + $0xa8] sm:$0xff] %v940
      %1005 = vst [vmem:[%s172 + $0xb0] sm:$0xff] %v941
      %1006 = vst [vmem:[%s172 + $0xb8] sm:$0xff] %v942
      %1007 = vst [vmem:[%s172 + $0xc0] sm:$0xff] %v943
      %1008 = vst [vmem:[%s172 + $0xc8] sm:$0xff] %v944
      %1009 = vst [vmem:[%s172 + $0xd0] sm:$0xff] %v945
      %1010 = vst [vmem:[%s172 + $0xd8] sm:$0xff] %v946
      %1011 = vst [vmem:[%s172 + $0xe0] sm:$0xff] %v947
      %1012 = vst [vmem:[%s172 + $0xe8] sm:$0xff] %v948
      %1013 = vst [vmem:[%s172 + $0xf0] sm:$0xff] %v949
      %1014 = vst [vmem:[%s172 + $0xf8] sm:$0xff] %v950
      %1015 = vst [vmem:[%s172 + $0x100] sm:$0xff] %v951
      %1016 = vst [vmem:[%s172 + $0x108] sm:$0xff] %v952
      %1017 = vst [vmem:[%s172 + $0x110] sm:$0xff] %v953
      %1018 = vst [vmem:[%s172 + $0x118] sm:$0xff] %v954
      %1019 = vst [vmem:[%s172 + $0x120] sm:$0xff] %v955
      %1020 = vst [vmem:[%s172 + $0x128] sm:$0xff] %v956
      %1021 = vst [vmem:[%s172 + $0x130] sm:$0xff] %v957
      %1022 = vst [vmem:[%s172 + $0x138] sm:$0xff] %v958
      %1023 = vst [vmem:[%s172 + $0x140] sm:$0xff] %v959
      %1024 = vst [vmem:[%s172 + $0x148] sm:$0xff] %v960
      %1025 = vst [vmem:[%s172 + $0x150] sm:$0xff] %v961
      %1026 = vst [vmem:[%s172 + $0x158] sm:$0xff] %v962
      %1027 = vst [vmem:[%s172 + $0x160] sm:$0xff] %v963
      %1028 = vst [vmem:[%s172 + $0x168] sm:$0xff] %v964
      %1029 = vst [vmem:[%s172 + $0x170] sm:$0xff] %v965
      %1030 = vst [vmem:[%s172 + $0x178] sm:$0xff] %v966
      %1031 = vst [vmem:[%s172 + $0x180] sm:$0xff] %v967
      %1032 = vst [vmem:[%s172 + $0x188] sm:$0xff] %v968
      %1033 = vst [vmem:[%s172 + $0x190] sm:$0xff] %v969
      %1034 = vst [vmem:[%s172 + $0x198] sm:$0xff] %v970
      %1035 = vst [vmem:[%s172 + $0x1a0] sm:$0xff] %v971
      %1036 = vst [vmem:[%s172 + $0x1a8] sm:$0xff] %v972
      %1037 = vst [vmem:[%s172 + $0x1b0] sm:$0xff] %v973
      %1038 = vst [vmem:[%s172 + $0x1b8] sm:$0xff] %v974
      %1039 = vst [vmem:[%s172 + $0x1c0] sm:$0xff] %v975
      %1040 = vst [vmem:[%s172 + $0x1c8] sm:$0xff] %v976
      %1041 = vst [vmem:[%s172 + $0x1d0] sm:$0xff] %v977
      %1042 = vst [vmem:[%s172 + $0x1d8] sm:$0xff] %v978
      %1043 = vst [vmem:[%s172 + $0x1e0] sm:$0xff] %v979
      %1044 = vst [vmem:[%s172 + $0x1e8] sm:$0xff] %v980
      %1045 = vst [vmem:[%s172 + $0x1f0] sm:$0xff] %v981
      %1046 = vst [vmem:[%s172 + $0x1f8] sm:$0xff] %v982
      %s1047 = smul.u32 64, %s14
      %p1048 = scmp.lt.s32.totalorder %s1047, 255
      %s1049 = scalar_select %p1048, %s1047, 255
      %s1050 = smul.addr %s1049, 8
      %s1051 = scalar_lea.vmem %s3, %s1050
      // Predicated region
      $region33: #{upscale_forward.1} parent=31 // pred_check
        %p1052 = pneg %p100
      $region34: #{upscale_forward.1} parent=31 // pred_check_branch
        %1054 = sbr.rel (%p1052) target = $region36
      $region35: #{upscale_forward.1} parent=31 // pred_region
        %s1055 = smul.u32 64, %s14
      $region36: #{upscale_forward.1} parent=31 // pred_fallthru
        _
    $region32: #{upscale_forward.1} parent=5 // pred_fallthru
      _
    %p1056 = scmp.le.s32.totalorder 2, %s9
    // Predicated region
    $region37: #{upscale_forward.1} parent=5 // pred_check
      %p1057 = pneg %p1056
    $region38: #{upscale_forward.1} parent=5 // pred_check_branch
      %1059 = sbr.rel (%p1057) target = $region40
    $region39: #{upscale_forward.1} parent=5 // pred_region
      %s1060 = ssub.s32 %s9, 2
      // Predicated region
      $region41: #{upscale_forward.1} parent=39 // pred_check
        %p1061 = pneg %p106
      $region42: #{upscale_forward.1} parent=39 // pred_check_branch
        %1063 = sbr.rel (%p1061) target = $region44
      $region43: #{upscale_forward.1} parent=39 // pred_region
        %s1064 = smul.u32 64, %s15
        %p1065 = scmp.lt.s32.totalorder %s1064, 255
        %s1066 = scalar_select %p1065, %s1064, 255
        %s1067 = smul.addr %s1066, 8
        %s1068 = scalar_lea.vmem %s3, %s1067
      $region44: #{upscale_forward.1} parent=39 // pred_fallthru
        _
    $region40: #{upscale_forward.1} parent=5 // pred_fallthru
      _
  $region6: #{upscale_forward.1} parent=0 // loop_footer
    %s13 = sadd.s32 1, %s9
  $region7: #{upscale_forward.1} parent=0 // loop_footer_branch
    %8 = sbr.rel target = $region3
  $region8: #{upscale_forward.1} parent=0 // loop_exit
    _

</llo_original>
